<compile_context>
chip_gen: v5e
topology: v5e:2x2
jax: 0.10.0
libtpu: 0.0.40
codegen_flags: <defaults>
</compile_context>

<pallas_src>
import functools

import jax
import jax.numpy as jnp
from jax.experimental import pallas as pl
from jax.experimental.pallas import tpu as pltpu


def _wgangp_kernel(alpha_ref, x_ref, gz_ref, w1_ref, w1t_ref, b1_ref, w2t_ref,
                   o_ref, acc_ref, *, lmbda, bs):
    # alpha: (TB, 1) f32   x, gz: (TB, D) f32
    # w1: (D, H) bf16      w1t: (H, D) bf16
    # b1: (1, H) f32       w2t: (1, H) f32
    i = pl.program_id(0)

    @pl.when(i == 0)
    def _init():
        acc_ref[...] = jnp.zeros_like(acc_ref)

    # interp = alpha * x + (1 - alpha) * Gz  ==  Gz + alpha * (x - Gz)
    alpha = alpha_ref[...]
    interp = gz_ref[...] + alpha * (x_ref[...] - gz_ref[...])        # (TB, D) f32

    # ---- critic forward (only hidden activations are needed) --------------
    h_pre = jnp.dot(interp.astype(jnp.bfloat16), w1_ref[...],
                    preferred_element_type=jnp.float32) + b1_ref[...]  # (TB, H)
    h = jnp.tanh(h_pre)
    # out = h @ W2 + b2 is scalar per example; its value does not enter the
    # penalty, only its gradient w.r.t. interp does.

    # ---- manual backward: d(sum_b D(interp_b)) / d interp ------------------
    grad_hpre = (1.0 - h * h) * w2t_ref[...]                          # (TB, H) f32
    grad_interp = jnp.dot(grad_hpre.astype(jnp.bfloat16), w1t_ref[...],
                          preferred_element_type=jnp.float32)          # (TB, D) f32

    # gradients.norm(2, dim=1)  ->  (TB, 1)
    gnorm = jnp.sqrt(jnp.sum(grad_interp * grad_interp, axis=1, keepdims=True))

    # accumulate sum over the batch of (||g|| - 1)^2
    acc_ref[...] += jnp.sum((gnorm - 1.0) ** 2, keepdims=True)        # (1, 1)

    @pl.when(i == pl.num_programs(0) - 1)
    def _finalize():
        o_ref[...] = (lmbda / bs) * acc_ref[...]


def wgangp_gradient_penalty(x, gz, alpha, w1, b1, w2, *, lmbda=10.0,
                            tile_b=None):
    """Pallas implementation of WGANGP.forward with a 2-layer tanh MLP critic.

    x, gz : (bs, D) float32
    alpha : (bs, 1) float32   (the torch.rand(bs, 1) sample)
    w1    : (D, H), b1: (H,), w2: (H, 1)  -- synthetic critic parameters

    NOTE: the closed-form backward inside the kernel is only valid for this
    specific 2-layer tanh critic.
    """
    # TODO(synk): optional self.mask path (interp * mask before disc) not implemented.
    bs, D = x.shape
    H = w1.shape[1]

    # Batch tile: multiple of 8 sublanes and divisor of bs; otherwise fall back
    # to a single full block (block shape == array shape is always legal).
    if tile_b is None:
        tile_b = min(bs, 256)
    if bs % tile_b != 0 or tile_b % 8 != 0:
        tile_b = bs
    grid = (bs // tile_b,)

    # Host-side weight prep: bf16 weights, pre-transposed W1 for the backward.
    w1_bf = w1.astype(jnp.bfloat16)
    w1t_bf = jnp.transpose(w1).astype(jnp.bfloat16)
    b1_row = b1.reshape(1, H).astype(jnp.float32)
    w2t = w2.reshape(1, H).astype(jnp.float32)       # W2^T as a row vector

    kernel = functools.partial(_wgangp_kernel, lmbda=float(lmbda), bs=bs)

    cost = pl.CostEstimate(
        flops=4 * bs * D * H,                         # fwd + bwd matmuls
        transcendentals=bs * H + bs,                  # tanh + sqrt
        bytes_accessed=(2 * bs * D * 4 + bs * 4       # x, gz, alpha (f32)
                        + 2 * D * H * 2 + 2 * H * 4   # W1, W1T (bf16), b1, W2T
                        + 4),
    )

    out = pl.pallas_call(
        kernel,
        out_shape=jax.ShapeDtypeStruct((1, 1), jnp.float32),
        grid_spec=pltpu.PrefetchScalarGridSpec(
            num_scalar_prefetch=0,
            grid=grid,
            in_specs=[
                pl.BlockSpec((tile_b, 1), lambda i: (i, 0)),   # alpha
                pl.BlockSpec((tile_b, D), lambda i: (i, 0)),   # x
                pl.BlockSpec((tile_b, D), lambda i: (i, 0)),   # Gz
                pl.BlockSpec((D, H), lambda i: (0, 0)),        # W1   (resident)
                pl.BlockSpec((H, D), lambda i: (0, 0)),        # W1^T (resident)
                pl.BlockSpec((1, H), lambda i: (0, 0)),        # b1   (resident)
                pl.BlockSpec((1, H), lambda i: (0, 0)),        # W2^T (resident)
            ],
            out_specs=pl.BlockSpec((1, 1), lambda i: (0, 0)),
            scratch_shapes=[pltpu.VMEM((1, 1), jnp.float32)],  # running sum
        ),
        compiler_params=pltpu.CompilerParams(
            dimension_semantics=("arbitrary",)),               # accumulation axis
        cost_estimate=cost,
    )(alpha.astype(jnp.float32), x.astype(jnp.float32), gz.astype(jnp.float32),
      w1_bf, w1t_bf, b1_row, w2t)
    return out[0, 0]


def _reference_gp(x, gz, alpha, w1, b1, w2, lmbda=10.0):
    """Plain-JAX reference using autodiff (mirrors torch.autograd.grad)."""
    def disc_sum(v):
        h = jnp.tanh(jnp.dot(v, w1) + b1)
        return jnp.dot(h, w2).sum()

    interp = alpha * x + (1.0 - alpha) * gz
    grads = jax.grad(disc_sum)(interp)
    gnorm = jnp.sqrt(jnp.sum(grads * grads, axis=1))
    return lmbda * jnp.mean((gnorm - 1.0) ** 2)


if __name__ == "__main__":
    key = jax.random.PRNGKey(0)
    kx, kg, ka, kw1, kb1, kw2 = jax.random.split(key, 6)

    bs, D, H = 16, 256, 128
    lmbda = 10.0

    x = jax.random.normal(kx, (bs, D), jnp.float32)
    gz = jax.random.normal(kg, (bs, D), jnp.float32)
    alpha = jax.random.uniform(ka, (bs, 1), jnp.float32)     # torch.rand(bs, 1)

    # Deterministic synthetic critic parameters (2-layer MLP, scalar output).
    w1 = jax.random.normal(kw1, (D, H), jnp.float32) * 0.05
    b1 = jax.random.normal(kb1, (H,), jnp.float32) * 0.05
    w2 = jax.random.normal(kw2, (H, 1), jnp.float32) * 0.05

    # tile_b=8 so the grid has 2 steps and the accumulator pattern is exercised.
    gp = wgangp_gradient_penalty(x, gz, alpha, w1, b1, w2, lmbda=lmbda, tile_b=8)
    gp = jax.block_until_ready(gp)

    ref = jax.block_until_ready(_reference_gp(x, gz, alpha, w1, b1, w2, lmbda))
    # bf16 matmul inputs with f32 accumulation: allow ~2% relative tolerance.
    assert abs(float(gp) - float(ref)) <= 2e-2 * (1.0 + abs(float(ref))), (
        f"mismatch: pallas={float(gp)} ref={float(ref)}")

    print("KERNEL_OK")
</pallas_src>

<mosaic_0001>
module attributes {stable_mosaic.version = 11 : i64} {
  func.func @_wgangp_kernel(%arg0: i32, %arg1: memref<8x1xf32, #tpu.memory_space<vmem>>, %arg2: memref<8x256xf32, #tpu.memory_space<vmem>>, %arg3: memref<8x256xf32, #tpu.memory_space<vmem>>, %arg4: memref<256x128xbf16, #tpu.memory_space<vmem>>, %arg5: memref<128x256xbf16, #tpu.memory_space<vmem>>, %arg6: memref<1x128xf32, #tpu.memory_space<vmem>>, %arg7: memref<1x128xf32, #tpu.memory_space<vmem>>, %arg8: memref<1x1xf32, #tpu.memory_space<vmem>>, %arg9: memref<1x1xf32, #tpu.memory_space<vmem>>) attributes {dimension_semantics = [#tpu.dimension_semantics<arbitrary>], iteration_bounds = array<i64: 2>, scalar_prefetch = 0 : i64, scratch_operands = 1 : i64, tpu.core_type = #tpu.core_type<tc>, window_params = [{transform_indices = @transform_0, window_bounds = array<i64: 8, 1>}, {transform_indices = @transform_1, window_bounds = array<i64: 8, 256>}, {transform_indices = @transform_2, window_bounds = array<i64: 8, 256>}, {pipeline_mode = #tpu.pipeline_mode<synchronous>, transform_indices = @transform_3, window_bounds = array<i64: 256, 128>}, {pipeline_mode = #tpu.pipeline_mode<synchronous>, transform_indices = @transform_4, window_bounds = array<i64: 128, 256>}, {pipeline_mode = #tpu.pipeline_mode<synchronous>, transform_indices = @transform_5, window_bounds = array<i64: 1, 128>}, {pipeline_mode = #tpu.pipeline_mode<synchronous>, transform_indices = @transform_6, window_bounds = array<i64: 1, 128>}, {pipeline_mode = #tpu.pipeline_mode<synchronous>, transform_indices = @transform_7, window_bounds = array<i64: 1, 1>}]} {
    %c0_i32 = arith.constant 0 : i32
    %0 = arith.cmpi eq, %arg0, %c0_i32 : i32
    %1 = arith.extui %0 : i1 to i32
    %c0_i32_0 = arith.constant 0 : i32
    %2 = arith.cmpi ne, %1, %c0_i32_0 : i32
    scf.if %2 {
      %cst_26 = arith.constant 0.000000e+00 : f32
      %45 = vector.broadcast %cst_26 : f32 to vector<1x1xf32>
      %c0_27 = arith.constant 0 : index
      %c0_28 = arith.constant 0 : index
      %46 = vector.load %arg9[%c0_27, %c0_28] : memref<1x1xf32, #tpu.memory_space<vmem>>, vector<1x1xf32>
      tpu.vector_store %arg9[%c0_27, %c0_28], %45 {strides = array<i32>} : memref<1x1xf32, #tpu.memory_space<vmem>>, vector<1x1xf32>,
    } else {
    }
    %c0 = arith.constant 0 : index
    %c0_1 = arith.constant 0 : index
    %3 = vector.load %arg1[%c0, %c0_1] : memref<8x1xf32, #tpu.memory_space<vmem>>, vector<8x1xf32>
    %c0_2 = arith.constant 0 : index
    %c0_3 = arith.constant 0 : index
    %4 = vector.load %arg3[%c0_2, %c0_3] : memref<8x256xf32, #tpu.memory_space<vmem>>, vector<8x256xf32>
    %c0_4 = arith.constant 0 : index
    %c0_5 = arith.constant 0 : index
    %5 = vector.load %arg2[%c0_4, %c0_5] : memref<8x256xf32, #tpu.memory_space<vmem>>, vector<8x256xf32>
    %c0_6 = arith.constant 0 : index
    %c0_7 = arith.constant 0 : index
    %6 = vector.load %arg3[%c0_6, %c0_7] : memref<8x256xf32, #tpu.memory_space<vmem>>, vector<8x256xf32>
    %7 = arith.subf %5, %6 : vector<8x256xf32>
    %8 = vector.broadcast %3 : vector<8x1xf32> to vector<8x256xf32>
    %9 = arith.mulf %8, %7 : vector<8x256xf32>
    %10 = arith.addf %4, %9 : vector<8x256xf32>
    %11 = arith.truncf %10 : vector<8x256xf32> to vector<8x256xbf16>
    %c0_8 = arith.constant 0 : index
    %c0_9 = arith.constant 0 : index
    %12 = vector.load %arg4[%c0_8, %c0_9] : memref<256x128xbf16, #tpu.memory_space<vmem>>, vector<256x128xbf16>
    %cst = arith.constant dense<0.000000e+00> : vector<8x128xf32>
    %13 = tpu.matmul %11, %12, %cst {dimension_numbers = #tpu.dot_dimension_numbers<[1], [0], [0], [1], [0, 0, 1, 1], [], []>} : vector<8x256xbf16>, vector<256x128xbf16>, vector<8x128xf32> -> vector<8x128xf32>
    %c0_10 = arith.constant 0 : index
    %c0_11 = arith.constant 0 : index
    %14 = vector.load %arg6[%c0_10, %c0_11] : memref<1x128xf32, #tpu.memory_space<vmem>>, vector<1x128xf32>
    %15 = vector.broadcast %14 : vector<1x128xf32> to vector<8x128xf32>
    %16 = arith.addf %13, %15 : vector<8x128xf32>
    %17 = math.tanh %16 : vector<8x128xf32>
    %18 = arith.mulf %17, %17 : vector<8x128xf32>
    %cst_12 = arith.constant 1.000000e+00 : f32
    %19 = vector.broadcast %cst_12 : f32 to vector<8x128xf32>
    %20 = arith.subf %19, %18 : vector<8x128xf32>
    %c0_13 = arith.constant 0 : index
    %c0_14 = arith.constant 0 : index
    %21 = vector.load %arg7[%c0_13, %c0_14] : memref<1x128xf32, #tpu.memory_space<vmem>>, vector<1x128xf32>
    %22 = vector.broadcast %21 : vector<1x128xf32> to vector<8x128xf32>
    %23 = arith.mulf %20, %22 : vector<8x128xf32>
    %24 = arith.truncf %23 : vector<8x128xf32> to vector<8x128xbf16>
    %c0_15 = arith.constant 0 : index
    %c0_16 = arith.constant 0 : index
    %25 = vector.load %arg5[%c0_15, %c0_16] : memref<128x256xbf16, #tpu.memory_space<vmem>>, vector<128x256xbf16>
    %cst_17 = arith.constant dense<0.000000e+00> : vector<8x256xf32>
    %26 = tpu.matmul %24, %25, %cst_17 {dimension_numbers = #tpu.dot_dimension_numbers<[1], [0], [0], [1], [0, 0, 1, 1], [], []>} : vector<8x128xbf16>, vector<128x256xbf16>, vector<8x256xf32> -> vector<8x256xf32>
    %27 = arith.mulf %26, %26 : vector<8x256xf32>
    %cst_18 = arith.constant dense<0.000000e+00> : vector<8xf32>
    %28 = vector.multi_reduction <add>, %27, %cst_18 [1] : vector<8x256xf32> to vector<8xf32>
    %29 = vector.shape_cast %28 : vector<8xf32> to vector<8x1xf32>
    %30 = math.sqrt %29 : vector<8x1xf32>
    %c0_19 = arith.constant 0 : index
    %c0_20 = arith.constant 0 : index
    %31 = vector.load %arg9[%c0_19, %c0_20] : memref<1x1xf32, #tpu.memory_space<vmem>>, vector<1x1xf32>
    %cst_21 = arith.constant 1.000000e+00 : f32
    %32 = vector.broadcast %cst_21 : f32 to vector<8x1xf32>
    %33 = arith.subf %30, %32 : vector<8x1xf32>
    %34 = arith.mulf %33, %33 : vector<8x1xf32>
    %35 = vector.shape_cast %34 : vector<8x1xf32> to vector<1x8x1xf32>
    %cst_22 = arith.constant dense<0.000000e+00> : vector<1xf32>
    %36 = vector.multi_reduction <add>, %35, %cst_22 [1, 2] : vector<1x8x1xf32> to vector<1xf32>
    %37 = vector.shape_cast %36 : vector<1xf32> to vector<1x1x1xf32>
    %38 = vector.extract %37[0, 0, 0] : f32 from vector<1x1x1xf32>
    %39 = vector.broadcast %38 : f32 to vector<1x1xf32>
    %40 = arith.addf %31, %39 : vector<1x1xf32>
    %c0_23 = arith.constant 0 : index
    %c0_24 = arith.constant 0 : index
    %41 = vector.load %arg9[%c0_23, %c0_24] : memref<1x1xf32, #tpu.memory_space<vmem>>, vector<1x1xf32>
    tpu.vector_store %arg9[%c0_23, %c0_24], %40 {strides = array<i32>} : memref<1x1xf32, #tpu.memory_space<vmem>>, vector<1x1xf32>,
    %c1_i32 = arith.constant 1 : i32
    %42 = arith.cmpi eq, %arg0, %c1_i32 : i32
    %43 = arith.extui %42 : i1 to i32
    %c0_i32_25 = arith.constant 0 : i32
    %44 = arith.cmpi ne, %43, %c0_i32_25 : i32
    scf.if %44 {
      %c0_26 = arith.constant 0 : index
      %c0_27 = arith.constant 0 : index
      %45 = vector.load %arg9[%c0_26, %c0_27] : memref<1x1xf32, #tpu.memory_space<vmem>>, vector<1x1xf32>
      %cst_28 = arith.constant 6.250000e-01 : f32
      %46 = vector.broadcast %cst_28 : f32 to vector<1x1xf32>
      %47 = arith.mulf %46, %45 : vector<1x1xf32>
      %c0_29 = arith.constant 0 : index
      %c0_30 = arith.constant 0 : index
      %48 = vector.load %arg8[%c0_29, %c0_30] : memref<1x1xf32, #tpu.memory_space<vmem>>, vector<1x1xf32>
      tpu.vector_store %arg8[%c0_29, %c0_30], %47 {strides = array<i32>} : memref<1x1xf32, #tpu.memory_space<vmem>>, vector<1x1xf32>,
    } else {
    }
    return
  }
  func.func @transform_0(%arg0: i32) -> (i32, i32) {
    %c0_i32 = arith.constant 0 : i32
    %c0_i32_0 = arith.constant 0 : i32
    return %arg0, %c0_i32 : i32, i32
  }
  func.func @transform_1(%arg0: i32) -> (i32, i32) {
    %c0_i32 = arith.constant 0 : i32
    %c0_i32_0 = arith.constant 0 : i32
    return %arg0, %c0_i32 : i32, i32
  }
  func.func @transform_2(%arg0: i32) -> (i32, i32) {
    %c0_i32 = arith.constant 0 : i32
    %c0_i32_0 = arith.constant 0 : i32
    return %arg0, %c0_i32 : i32, i32
  }
  func.func @transform_3(%arg0: i32) -> (i32, i32) {
    %c0_i32 = arith.constant 0 : i32
    %c0_i32_0 = arith.constant 0 : i32
    %c0_i32_1 = arith.constant 0 : i32
    return %c0_i32, %c0_i32_0 : i32, i32
  }
  func.func @transform_4(%arg0: i32) -> (i32, i32) {
    %c0_i32 = arith.constant 0 : i32
    %c0_i32_0 = arith.constant 0 : i32
    %c0_i32_1 = arith.constant 0 : i32
    return %c0_i32, %c0_i32_0 : i32, i32
  }
  func.func @transform_5(%arg0: i32) -> (i32, i32) {
    %c0_i32 = arith.constant 0 : i32
    %c0_i32_0 = arith.constant 0 : i32
    %c0_i32_1 = arith.constant 0 : i32
    return %c0_i32, %c0_i32_0 : i32, i32
  }
  func.func @transform_6(%arg0: i32) -> (i32, i32) {
    %c0_i32 = arith.constant 0 : i32
    %c0_i32_0 = arith.constant 0 : i32
    %c0_i32_1 = arith.constant 0 : i32
    return %c0_i32, %c0_i32_0 : i32, i32
  }
  func.func @transform_7(%arg0: i32) -> (i32, i32) {
    %c0_i32 = arith.constant 0 : i32
    %c0_i32_0 = arith.constant 0 : i32
    %c0_i32_1 = arith.constant 0 : i32
    return %c0_i32, %c0_i32_0 : i32, i32
  }
}

</mosaic_0001>

<llo_original>
// kernel: tpu_custom_call.1
$region0: #{tpu_custom_call.1}
  #allocation0 [shape = 'u32[]', space=smem, size = 0x4, offset = 0x4, fixed_abs, tag = 'smem constant byte address 0x4 - core index']
  #allocation1 [shape = 'u32[72,128]{1,0:T(1,128)}', space=vmem, size = 0x9000, scoped, tag = 'internal scratch']
  #allocation2 [shape = 'f32[1,1]{1,0:T(1,128)}', space=vmem, size = 0x200, scoped, tag = 'scratch operand']
  %s0 = inlined_call_operand.vmem [shape: f32[16,1], index: 0, kind: input, shape index: {}]
  %s1 = inlined_call_operand.hbm [shape: f32[16,256], index: 1, kind: input, shape index: {}]
  %s2 = inlined_call_operand.hbm [shape: f32[16,256], index: 2, kind: input, shape index: {}]
  %s3 = inlined_call_operand.hbm [shape: bf16[256,128], index: 3, kind: input, shape index: {}]
  %s4 = inlined_call_operand.hbm [shape: bf16[128,256], index: 4, kind: input, shape index: {}]
  %s5 = inlined_call_operand.vmem [shape: f32[1,128], index: 5, kind: input, shape index: {}]
  %s6 = inlined_call_operand.vmem [shape: f32[1,128], index: 6, kind: input, shape index: {}]
  %s7 = inlined_call_operand.hbm [shape: f32[1,1], index: 7, kind: output, shape index: {}]
  %s8 = sld [smem:[#allocation0]]
  $region85: #{tpu_custom_call.1} parent=0
    _
  %s10 = ssub.s32 1, %s8
  %s11 = scalar_select 0, %s10, %s8
  $region1: #{tpu_custom_call.1} parent=0
    #allocation3 [shape = 'u8[16384]{0}', space=vmem, size = 0x4000, scoped, tag = 'input window, operand 1']
    #allocation4 [shape = 's32[2]{0}', space=sflag, size = 0x8, scoped, tag = 'scoped memory for tpu_custom_call.1']
    #allocation5 [shape = 's32[2]{0}', space=sflag, size = 0x8, scoped, tag = 'scoped memory for tpu_custom_call.1']
    #allocation6 [shape = 'u8[16384]{0}', space=vmem, size = 0x4000, scoped, tag = 'input window, operand 2']
    #allocation7 [shape = 's32[2]{0}', space=sflag, size = 0x8, scoped, tag = 'scoped memory for tpu_custom_call.1']
    #allocation8 [shape = 'u8[65536]{0}', space=vmem, size = 0x10000, scoped, tag = 'input window, operand 3, single buffered']
    #allocation9 [shape = 'u8[65536]{0}', space=vmem, size = 0x10000, scoped, tag = 'input window, operand 4, single buffered']
    #allocation10 [shape = 's32[1]{0}', space=sflag, size = 0x4, scoped, tag = 'scoped memory for tpu_custom_call.1']
    #allocation11 [shape = 'u8[512]{0}', space=vmem, size = 0x400, scoped, tag = 'output window, operand 0, single buffered']
    %12 = vsyncpa [#allocation4], 0
    %s13 = scalar_lea.sflag [#allocation4], 1
    %14 = vsyncpa %s13, 0
    %15 = vsyncpa [#allocation7], 0
    %s16 = scalar_lea.sflag [#allocation7], 1
    %17 = vsyncpa %s16, 0
    %18 = vsyncpa [#allocation10], 0
    %19 = vsyncpa [#allocation5], 0
    loop: start=0, step=1, limit=4
    $region2: #{tpu_custom_call.1} parent=1 // loop_pre_header
      _
    $region3: #{tpu_custom_call.1} parent=1 // loop_header
      %s21 = sphi 0, %s25
      %p22 = scmp.ge.s32.totalorder %s21, 4
      %s31 = sphi 0, %s33
      %s34 = sphi 0, %s31
      %s35 = sphi 0, %s34
      %s51 = sphi 0, %s35
      %s57 = sphi 0, %s59
      %s60 = sphi 0, %s57
      %s61 = sphi 0, %s60
      %s77 = sphi 0, %s61
      %s83 = sphi 0, %s85
      %s86 = sphi 0, %s83
      %s87 = sphi 0, %s86
      %s103 = sphi 0, %s87
      %s107 = sphi 0, %s107
      %s109 = sphi 0, %s107
      %s110 = sphi 0, %s109
      %s124 = sphi 0, %s110
      %s128 = sphi 0, %s128
      %s130 = sphi 0, %s128
      %s131 = sphi 0, %s130
      %s145 = sphi 0, %s131
      %s149 = sphi 0, %s149
      %s151 = sphi 0, %s149
      %s152 = sphi 0, %s151
      %s166 = sphi 0, %s152
      %s170 = sphi 0, %s170
      %s172 = sphi 0, %s170
      %s173 = sphi 0, %s172
      %s187 = sphi 0, %s173
      %s191 = sphi 0, %s191
      %s193 = sphi 0, %s191
      %s194 = sphi 0, %s193
      %s208 = sphi 0, %s194
    $region4: #{tpu_custom_call.1} parent=1 // loop_header_branch
      %24 = sbr.rel (%p22) target = $region8
    $region5: #{tpu_custom_call.1} parent=1 // loop_body
      %s26 = ssub.s32 %s21, 1
      %s27 = ssub.s32 %s21, 2
      %s28 = sadd.s32 %s21, 1
      %s29 = ssub.s32 %s21, %s28
      %p30 = scmp.eq.s32.totalorder %s29, 0
      %s32 = sadd.s32 %s31, 1
      %s33 = scalar_select %p30, %s31, %s32
      %p36 = pneg %p30
      %p37 = scmp.eq.s32.totalorder %s21, 1
      %p38 = por %p36, %p37
      %p39 = scmp.ne.s32.totalorder %s31, %s34
      %p40 = scmp.eq.s32.totalorder %s21, 0
      %p41 = por %p39, %p40
      %p42 = scmp.ne.s32.totalorder %s31, %s34
      %p43 = scmp.eq.s32.totalorder %s26, 1
      %p44 = por %p42, %p43
      %p45 = scmp.ne.s32.totalorder %s34, %s35
      %p46 = scmp.eq.s32.totalorder %s26, 0
      %p47 = por %p45, %p46
      %p48 = scmp.ne.s32.totalorder %s34, %s35
      %p49 = scmp.eq.s32.totalorder %s27, 1
      %p50 = por %p48, %p49
      %p52 = scmp.ne.s32.totalorder %s35, %s51
      %p53 = scmp.eq.s32.totalorder %s27, 0
      %p54 = por %p52, %p53
      %s55 = ssub.s32 %s21, %s28
      %p56 = scmp.eq.s32.totalorder %s55, 0
      %s58 = sadd.s32 %s57, 1
      %s59 = scalar_select %p56, %s57, %s58
      %p62 = pneg %p56
      %p63 = scmp.eq.s32.totalorder %s21, 1
      %p64 = por %p62, %p63
      %p65 = scmp.ne.s32.totalorder %s57, %s60
      %p66 = scmp.eq.s32.totalorder %s21, 0
      %p67 = por %p65, %p66
      %p68 = scmp.ne.s32.totalorder %s57, %s60
      %p69 = scmp.eq.s32.totalorder %s26, 1
      %p70 = por %p68, %p69
      %p71 = scmp.ne.s32.totalorder %s60, %s61
      %p72 = scmp.eq.s32.totalorder %s26, 0
      %p73 = por %p71, %p72
      %p74 = scmp.ne.s32.totalorder %s60, %s61
      %p75 = scmp.eq.s32.totalorder %s27, 1
      %p76 = por %p74, %p75
      %p78 = scmp.ne.s32.totalorder %s61, %s77
      %p79 = scmp.eq.s32.totalorder %s27, 0
      %p80 = por %p78, %p79
      %s81 = ssub.s32 %s21, %s28
      %p82 = scmp.eq.s32.totalorder %s81, 0
      %s84 = sadd.s32 %s83, 1
      %s85 = scalar_select %p82, %s83, %s84
      %p88 = pneg %p82
      %p89 = scmp.eq.s32.totalorder %s21, 1
      %p90 = por %p88, %p89
      %p91 = scmp.ne.s32.totalorder %s83, %s86
      %p92 = scmp.eq.s32.totalorder %s21, 0
      %p93 = por %p91, %p92
      %p94 = scmp.ne.s32.totalorder %s83, %s86
      %p95 = scmp.eq.s32.totalorder %s26, 1
      %p96 = por %p94, %p95
      %p97 = scmp.ne.s32.totalorder %s86, %s87
      %p98 = scmp.eq.s32.totalorder %s26, 0
      %p99 = por %p97, %p98
      %p100 = scmp.ne.s32.totalorder %s86, %s87
      %p101 = scmp.eq.s32.totalorder %s27, 1
      %p102 = por %p100, %p101
      %p104 = scmp.ne.s32.totalorder %s87, %s103
      %p105 = scmp.eq.s32.totalorder %s27, 0
      %p106 = por %p104, %p105
      %s108 = sadd.s32 %s107, 1
      %p111 = scmp.eq.s32.totalorder %s21, 1
      %p112 = scmp.ne.s32.totalorder %s107, %s109
      %p113 = scmp.eq.s32.totalorder %s21, 0
      %p114 = por %p112, %p113
      %p115 = scmp.ne.s32.totalorder %s107, %s109
      %p116 = scmp.eq.s32.totalorder %s26, 1
      %p117 = por %p115, %p116
      %p118 = scmp.ne.s32.totalorder %s109, %s110
      %p119 = scmp.eq.s32.totalorder %s26, 0
      %p120 = por %p118, %p119
      %p121 = scmp.ne.s32.totalorder %s109, %s110
      %p122 = scmp.eq.s32.totalorder %s27, 1
      %p123 = por %p121, %p122
      %p125 = scmp.ne.s32.totalorder %s110, %s124
      %p126 = scmp.eq.s32.totalorder %s27, 0
      %p127 = por %p125, %p126
      %s129 = sadd.s32 %s128, 1
      %p132 = scmp.eq.s32.totalorder %s21, 1
      %p133 = scmp.ne.s32.totalorder %s128, %s130
      %p134 = scmp.eq.s32.totalorder %s21, 0
      %p135 = por %p133, %p134
      %p136 = scmp.ne.s32.totalorder %s128, %s130
      %p137 = scmp.eq.s32.totalorder %s26, 1
      %p138 = por %p136, %p137
      %p139 = scmp.ne.s32.totalorder %s130, %s131
      %p140 = scmp.eq.s32.totalorder %s26, 0
      %p141 = por %p139, %p140
      %p142 = scmp.ne.s32.totalorder %s130, %s131
      %p143 = scmp.eq.s32.totalorder %s27, 1
      %p144 = por %p142, %p143
      %p146 = scmp.ne.s32.totalorder %s131, %s145
      %p147 = scmp.eq.s32.totalorder %s27, 0
      %p148 = por %p146, %p147
      %s150 = sadd.s32 %s149, 1
      %p153 = scmp.eq.s32.totalorder %s21, 1
      %p154 = scmp.ne.s32.totalorder %s149, %s151
      %p155 = scmp.eq.s32.totalorder %s21, 0
      %p156 = por %p154, %p155
      %p157 = scmp.ne.s32.totalorder %s149, %s151
      %p158 = scmp.eq.s32.totalorder %s26, 1
      %p159 = por %p157, %p158
      %p160 = scmp.ne.s32.totalorder %s151, %s152
      %p161 = scmp.eq.s32.totalorder %s26, 0
      %p162 = por %p160, %p161
      %p163 = scmp.ne.s32.totalorder %s151, %s152
      %p164 = scmp.eq.s32.totalorder %s27, 1
      %p165 = por %p163, %p164
      %p167 = scmp.ne.s32.totalorder %s152, %s166
      %p168 = scmp.eq.s32.totalorder %s27, 0
      %p169 = por %p167, %p168
      %s171 = sadd.s32 %s170, 1
      %p174 = scmp.eq.s32.totalorder %s21, 1
      %p175 = scmp.ne.s32.totalorder %s170, %s172
      %p176 = scmp.eq.s32.totalorder %s21, 0
      %p177 = por %p175, %p176
      %p178 = scmp.ne.s32.totalorder %s170, %s172
      %p179 = scmp.eq.s32.totalorder %s26, 1
      %p180 = por %p178, %p179
      %p181 = scmp.ne.s32.totalorder %s172, %s173
      %p182 = scmp.eq.s32.totalorder %s26, 0
      %p183 = por %p181, %p182
      %p184 = scmp.ne.s32.totalorder %s172, %s173
      %p185 = scmp.eq.s32.totalorder %s27, 1
      %p186 = por %p184, %p185
      %p188 = scmp.ne.s32.totalorder %s173, %s187
      %p189 = scmp.eq.s32.totalorder %s27, 0
      %p190 = por %p188, %p189
      %s192 = sadd.s32 %s191, 1
      %p195 = scmp.eq.s32.totalorder %s21, 1
      %p196 = scmp.ne.s32.totalorder %s191, %s193
      %p197 = scmp.eq.s32.totalorder %s21, 0
      %p198 = por %p196, %p197
      %p199 = scmp.ne.s32.totalorder %s191, %s193
      %p200 = scmp.eq.s32.totalorder %s26, 1
      %p201 = por %p199, %p200
      %p202 = scmp.ne.s32.totalorder %s193, %s194
      %p203 = scmp.eq.s32.totalorder %s26, 0
      %p204 = por %p202, %p203
      %p205 = scmp.ne.s32.totalorder %s193, %s194
      %p206 = scmp.eq.s32.totalorder %s27, 1
      %p207 = por %p205, %p206
      %p209 = scmp.ne.s32.totalorder %s194, %s208
      %p210 = scmp.eq.s32.totalorder %s27, 0
      %p211 = por %p209, %p210
      %p212 = scmp.le.s32.totalorder 1, %s21
      %p213 = scmp.lt.s32.totalorder %s21, 3
      %p214 = pnand %p212, %p213
      %p215 = pneg %p214
      // Predicated region
      $region9: #{tpu_custom_call.1} parent=5 // pred_check
        _
      $region10: #{tpu_custom_call.1} parent=5 // pred_check_branch
        %217 = sbr.rel (%p214) target = $region12
      $region11: #{tpu_custom_call.1} parent=5 // pred_region
        %s218 = ssub.s32 %s21, 1
        // Predicated region
        $region13: #{tpu_custom_call.1} parent=11 // pred_check
          %p219 = pneg %p120
        $region14: #{tpu_custom_call.1} parent=11 // pred_check_branch
          %221 = sbr.rel (%p219) target = $region16
        $region15: #{tpu_custom_call.1} parent=11 // pred_region
          %223 = vsyncadd [#allocation7], 0
          %s224 = sshll.u32 %s3, 4
          %s225 = int_to_ptr.hbm [resolvable:$true] %s224
          %s226 = sshll.u32 [#allocation8], 4
          %s227 = int_to_ptr.vmem [resolvable:$true] %s226
          %232 = dma.hbm_to_vmem [thread:$0]  %s225, 2048, %s227, [#allocation7], 64, 64, 4
        $region16: #{tpu_custom_call.1} parent=11 // pred_fallthru
          _
        // Predicated region
        $region17: #{tpu_custom_call.1} parent=11 // pred_check
          %p233 = pneg %p141
        $region18: #{tpu_custom_call.1} parent=11 // pred_check_branch
          %235 = sbr.rel (%p233) target = $region20
        $region19: #{tpu_custom_call.1} parent=11 // pred_region
          %237 = vsyncadd [#allocation10], 0
          %s238 = sshll.u32 %s4, 4
          %s239 = int_to_ptr.hbm [resolvable:$true] %s238
          %s240 = sshll.u32 [#allocation9], 4
          %s241 = int_to_ptr.vmem [resolvable:$true] %s240
          %246 = dma.hbm_to_vmem [thread:$0]  %s239, 2048, %s241, [#allocation10], 128, 128, 8
        $region20: #{tpu_custom_call.1} parent=11 // pred_fallthru
          _
        // Predicated region
        $region21: #{tpu_custom_call.1} parent=11 // pred_check
          %p247 = pneg %p162
        $region22: #{tpu_custom_call.1} parent=11 // pred_check_branch
          %249 = sbr.rel (%p247) target = $region24
        $region23: #{tpu_custom_call.1} parent=11 // pred_region
          _
        $region24: #{tpu_custom_call.1} parent=11 // pred_fallthru
          _
        // Predicated region
        $region25: #{tpu_custom_call.1} parent=11 // pred_check
          %p250 = pneg %p183
        $region26: #{tpu_custom_call.1} parent=11 // pred_check_branch
          %252 = sbr.rel (%p250) target = $region28
        $region27: #{tpu_custom_call.1} parent=11 // pred_region
          _
        $region28: #{tpu_custom_call.1} parent=11 // pred_fallthru
          _
      $region12: #{tpu_custom_call.1} parent=5 // pred_fallthru
        _
      %p253 = scmp.lt.s32.totalorder %s21, 2
      // Predicated region
      $region29: #{tpu_custom_call.1} parent=5 // pred_check
        %p254 = pneg %p253
      $region30: #{tpu_custom_call.1} parent=5 // pred_check_branch
        %256 = sbr.rel (%p254) target = $region32
      $region31: #{tpu_custom_call.1} parent=5 // pred_region
        // Predicated region
        $region33: #{tpu_custom_call.1} parent=31 // pred_check
          %p257 = pneg %p41
        $region34: #{tpu_custom_call.1} parent=31 // pred_check_branch
          %259 = sbr.rel (%p257) target = $region36
        $region35: #{tpu_custom_call.1} parent=31 // pred_region
          %p260 = scmp.lt.s32.totalorder %s21, 1
          %s261 = scalar_select %p260, %s21, 1
          %s262 = smul.addr %s261, 8
          %s263 = scalar_lea.vmem %s0, %s262
        $region36: #{tpu_custom_call.1} parent=31 // pred_fallthru
          _
        // Predicated region
        $region37: #{tpu_custom_call.1} parent=31 // pred_check
          %p264 = pneg %p67
        $region38: #{tpu_custom_call.1} parent=31 // pred_check_branch
          %266 = sbr.rel (%p264) target = $region40
        $region39: #{tpu_custom_call.1} parent=31 // pred_region
          %s267 = sand.u32 %s57, 1
          %s268 = scalar_lea.sflag [#allocation4], %s267
          %s269 = sand.u32 %s57, 1
          %s270 = smul.addr %s269, 16
          %s271 = scalar_lea.vmem [#allocation3], %s270
          %273 = vsyncadd %s268, 0
          %s274 = smul.addr %s21, 2
          %s275 = smul.addr %s274, 8
          %s276 = scalar_lea.hbm %s1, %s275
          %s278 = sshll.u32 %s276, 4
          %s279 = int_to_ptr.hbm [resolvable:$true] %s278
          %s280 = sshll.u32 %s271, 4
          %s281 = int_to_ptr.vmem [resolvable:$true] %s280
          %283 = dma.hbm_to_vmem [thread:$0]  %s279, 256, %s281, %s268
        $region40: #{tpu_custom_call.1} parent=31 // pred_fallthru
          _
        // Predicated region
        $region41: #{tpu_custom_call.1} parent=31 // pred_check
          %p284 = pneg %p93
        $region42: #{tpu_custom_call.1} parent=31 // pred_check_branch
          %286 = sbr.rel (%p284) target = $region44
        $region43: #{tpu_custom_call.1} parent=31 // pred_region
          %s287 = sand.u32 %s21, 1
          %s288 = scalar_lea.sflag [#allocation7], %s287
          %s289 = sand.u32 %s83, 1
          %s290 = smul.addr %s289, 16
          %s291 = scalar_lea.vmem [#allocation6], %s290
          %293 = vsyncadd %s288, 0
          %s294 = smul.addr %s21, 2
          %s295 = smul.addr %s294, 8
          %s296 = scalar_lea.hbm %s2, %s295
          %s298 = sshll.u32 %s296, 4
          %s299 = int_to_ptr.hbm [resolvable:$true] %s298
          %s300 = sshll.u32 %s291, 4
          %s301 = int_to_ptr.vmem [resolvable:$true] %s300
          %303 = dma.hbm_to_vmem [thread:$0]  %s299, 256, %s301, %s288
        $region44: #{tpu_custom_call.1} parent=31 // pred_fallthru
          _
      $region32: #{tpu_custom_call.1} parent=5 // pred_fallthru
        _
      %p304 = scmp.le.s32.totalorder 1, %s21
      %p305 = scmp.lt.s32.totalorder %s21, 3
      %p306 = pnand %p304, %p305
      %p307 = pneg %p306
      // Predicated region
      $region45: #{tpu_custom_call.1} parent=5 // pred_check
        _
      $region46: #{tpu_custom_call.1} parent=5 // pred_check_branch
        %309 = sbr.rel (%p306) target = $region48
      $region47: #{tpu_custom_call.1} parent=5 // pred_region
        %s310 = ssub.s32 %s21, 1
        %s311 = sand.u32 %s60, 1
        %s312 = scalar_lea.sflag [#allocation4], %s311
        %s313 = sand.u32 %s60, 1
        %s314 = smul.addr %s313, 16
        %s315 = scalar_lea.vmem [#allocation3], %s314
        // Predicated region
        $region49: #{tpu_custom_call.1} parent=47 // pred_check
          %p316 = pneg %p73
        $region50: #{tpu_custom_call.1} parent=47 // pred_check_branch
          %318 = sbr.rel (%p316) target = $region52
        $region51: #{tpu_custom_call.1} parent=47 // pred_region
          %320 = dma.done %s312, 256
        $region52: #{tpu_custom_call.1} parent=47 // pred_fallthru
          _
        %s321 = sand.u32 %s26, 1
        %s322 = scalar_lea.sflag [#allocation7], %s321
        %s323 = sand.u32 %s86, 1
        %s324 = smul.addr %s323, 16
        %s325 = scalar_lea.vmem [#allocation6], %s324
        // Predicated region
        $region53: #{tpu_custom_call.1} parent=47 // pred_check
          %p326 = pneg %p99
        $region54: #{tpu_custom_call.1} parent=47 // pred_check_branch
          %328 = sbr.rel (%p326) target = $region56
        $region55: #{tpu_custom_call.1} parent=47 // pred_region
          %330 = dma.done %s322, 256
        $region56: #{tpu_custom_call.1} parent=47 // pred_fallthru
          _
        // Predicated region
        $region57: #{tpu_custom_call.1} parent=47 // pred_check
          %p331 = pneg %p120
        $region58: #{tpu_custom_call.1} parent=47 // pred_check_branch
          %333 = sbr.rel (%p331) target = $region60
        $region59: #{tpu_custom_call.1} parent=47 // pred_region
          %335 = dma.done [#allocation7], 2048
        $region60: #{tpu_custom_call.1} parent=47 // pred_fallthru
          _
        // Predicated region
        $region61: #{tpu_custom_call.1} parent=47 // pred_check
          %p336 = pneg %p141
        $region62: #{tpu_custom_call.1} parent=47 // pred_check_branch
          %338 = sbr.rel (%p336) target = $region64
        $region63: #{tpu_custom_call.1} parent=47 // pred_region
          %340 = dma.done [#allocation10], 2048
        $region64: #{tpu_custom_call.1} parent=47 // pred_fallthru
          _
        %p341 = scmp.lt.s32.totalorder %s26, 1
        %s342 = scalar_select %p341, %s26, 1
        %s343 = smul.addr %s342, 8
        %s344 = scalar_lea.vmem %s0, %s343
        %p345 = pneg %p47
        %p346 = pneg %p44
        %s347 = sand.u32 %s60, 1
        %s348 = scalar_lea.sflag [#allocation4], %s347
        %s349 = sand.u32 %s60, 1
        %s350 = smul.addr %s349, 16
        %s351 = scalar_lea.vmem [#allocation3], %s350
        %p352 = pneg %p73
        %p353 = pneg %p70
        %s354 = sand.u32 %s26, 1
        %s355 = scalar_lea.sflag [#allocation7], %s354
        %s356 = sand.u32 %s86, 1
        %s357 = smul.addr %s356, 16
        %s358 = scalar_lea.vmem [#allocation6], %s357
        %p359 = pneg %p99
        %p360 = pneg %p96
        %p361 = pneg %p120
        %p362 = pneg %p117
        %p363 = pneg %p141
        %p364 = pneg %p138
        %p365 = pneg %p162
        %p366 = pneg %p159
        %p367 = pneg %p183
        %p368 = pneg %p180
        %p369 = pneg %p204
        %p370 = pneg %p201
        %p371 = scmp.lt.s32.totalorder %s26, 1
        %s372 = scalar_select %p371, %s26, 1
        %s373 = smul.addr %s372, 8
        %s374 = scalar_lea.vmem %s0, %s373
        %p375 = scmp.eq.s32.totalorder %s26, 0
        // Predicated region
        $region65: #{tpu_custom_call.1} parent=47 // pred_check
          %p376 = pneg %p375
        $region66: #{tpu_custom_call.1} parent=47 // pred_check_branch
          %378 = sbr.rel (%p376) target = $region68
        $region67: #{tpu_custom_call.1} parent=47 // pred_region
          %vm379 = vcmask 0
          %380 = vst.msk [vmem:[#allocation2] sm:$0x1] %vm379, 0.0
        $region68: #{tpu_custom_call.1} parent=47 // pred_fallthru
          _
        %v381 = vld [vmem:[%s374] sm:$0xff]
        %v382 = vld [vmem:[%s325] sm:$0xff]
        %v383 = vld [vmem:[%s325 + $0x8] sm:$0xff]
        %v384 = vld [vmem:[%s315] sm:$0xff]
        %v385 = vld [vmem:[%s315 + $0x8] sm:$0xff]
        %v386 = vsub.f32 %v384, %v382
        %v387 = vsub.f32 %v385, %v383
        %389 = vset.pattern.permute.xlu0 0
        %390 = vperm.xlu0 %389, %v381
        %v391 = vpop.permute.xlu0 %390
        %v393 = vmul.f32 %v391, %v386
        %v394 = vmul.f32 %v391, %v387
        %v395 = vadd.f32 %v382, %v393
        %v396 = vadd.f32 %v383, %v394
        %v397 = vpack.c.bf16 %v395, %v395
        %v398 = vpack.c.bf16 %v396, %v396
        %v399 = vld [vmem:[#allocation8] sm:$0xf]
        %v400 = vld [vmem:[#allocation8 + $0x4] sm:$0xf]
        %v401 = vld [vmem:[#allocation8 + $0x8] sm:$0xf]
        %v402 = vld [vmem:[#allocation8 + $0xc] sm:$0xf]
        %v403 = vld [vmem:[#allocation8 + $0x10] sm:$0xf]
        %v404 = vld [vmem:[#allocation8 + $0x14] sm:$0xf]
        %v405 = vld [vmem:[#allocation8 + $0x18] sm:$0xf]
        %v406 = vld [vmem:[#allocation8 + $0x1c] sm:$0xf]
        %v407 = vld [vmem:[#allocation8 + $0x20] sm:$0xf]
        %v408 = vld [vmem:[#allocation8 + $0x24] sm:$0xf]
        %v409 = vld [vmem:[#allocation8 + $0x28] sm:$0xf]
        %v410 = vld [vmem:[#allocation8 + $0x2c] sm:$0xf]
        %v411 = vld [vmem:[#allocation8 + $0x30] sm:$0xf]
        %v412 = vld [vmem:[#allocation8 + $0x34] sm:$0xf]
        %v413 = vld [vmem:[#allocation8 + $0x38] sm:$0xf]
        %v414 = vld [vmem:[#allocation8 + $0x3c] sm:$0xf]
        %v415 = vld [vmem:[#allocation8 + $0x40] sm:$0xf]
        %v416 = vld [vmem:[#allocation8 + $0x44] sm:$0xf]
        %v417 = vld [vmem:[#allocation8 + $0x48] sm:$0xf]
        %v418 = vld [vmem:[#allocation8 + $0x4c] sm:$0xf]
        %v419 = vld [vmem:[#allocation8 + $0x50] sm:$0xf]
        %v420 = vld [vmem:[#allocation8 + $0x54] sm:$0xf]
        %v421 = vld [vmem:[#allocation8 + $0x58] sm:$0xf]
        %v422 = vld [vmem:[#allocation8 + $0x5c] sm:$0xf]
        %v423 = vld [vmem:[#allocation8 + $0x60] sm:$0xf]
        %v424 = vld [vmem:[#allocation8 + $0x64] sm:$0xf]
        %v425 = vld [vmem:[#allocation8 + $0x68] sm:$0xf]
        %v426 = vld [vmem:[#allocation8 + $0x6c] sm:$0xf]
        %v427 = vld [vmem:[#allocation8 + $0x70] sm:$0xf]
        %v428 = vld [vmem:[#allocation8 + $0x74] sm:$0xf]
        %v429 = vld [vmem:[#allocation8 + $0x78] sm:$0xf]
        %v430 = vld [vmem:[#allocation8 + $0x7c] sm:$0xf]
        %v431 = vld [vmem:[%s5] sm:$0x1]
        %v433 = vperm.slane %v431, 0
        %v467 = vunpack.c.l.b16 %v399
        %v468 = vunpack.c.l.b16 %v400
        %v469 = vunpack.c.l.b16 %v401
        %v470 = vunpack.c.l.b16 %v402
        %v471 = vunpack.c.l.b16 %v403
        %v472 = vunpack.c.l.b16 %v404
        %v473 = vunpack.c.l.b16 %v405
        %v474 = vunpack.c.l.b16 %v406
        %v475 = vunpack.c.l.b16 %v407
        %v476 = vunpack.c.l.b16 %v408
        %v477 = vunpack.c.l.b16 %v409
        %v478 = vunpack.c.l.b16 %v410
        %v479 = vunpack.c.l.b16 %v411
        %v480 = vunpack.c.l.b16 %v412
        %v481 = vunpack.c.l.b16 %v413
        %v482 = vunpack.c.l.b16 %v414
        %v483 = vunpack.c.l.b16 %v415
        %v484 = vunpack.c.l.b16 %v416
        %v485 = vunpack.c.l.b16 %v417
        %v486 = vunpack.c.l.b16 %v418
        %v487 = vunpack.c.l.b16 %v419
        %v488 = vunpack.c.l.b16 %v420
        %v489 = vunpack.c.l.b16 %v421
        %v490 = vunpack.c.l.b16 %v422
        %v491 = vunpack.c.l.b16 %v423
        %v492 = vunpack.c.l.b16 %v424
        %v493 = vunpack.c.l.b16 %v425
        %v494 = vunpack.c.l.b16 %v426
        %v495 = vunpack.c.l.b16 %v427
        %v496 = vunpack.c.l.b16 %v428
        %v497 = vunpack.c.l.b16 %v429
        %v498 = vunpack.c.l.b16 %v430
        %v499 = vpack.c.b16 %v468, %v467
        %v500 = vpack.c.b16 %v470, %v469
        %v501 = vpack.c.b16 %v472, %v471
        %v502 = vpack.c.b16 %v474, %v473
        %v503 = vpack.c.b16 %v476, %v475
        %v504 = vpack.c.b16 %v478, %v477
        %v505 = vpack.c.b16 %v480, %v479
        %v506 = vpack.c.b16 %v482, %v481
        %v507 = vpack.c.b16 %v484, %v483
        %v508 = vpack.c.b16 %v486, %v485
        %v509 = vpack.c.b16 %v488, %v487
        %v510 = vpack.c.b16 %v490, %v489
        %v511 = vpack.c.b16 %v492, %v491
        %v512 = vpack.c.b16 %v494, %v493
        %v513 = vpack.c.b16 %v496, %v495
        %v514 = vpack.c.b16 %v498, %v497
        %531 = vmatpush.bf16.msra.mxu0 %v506
        %532 = vmatpush.bf16.msra.mxu0 %v505
        %533 = vmatpush.bf16.msra.mxu0 %v504
        %534 = vmatpush.bf16.msra.mxu0 %v503
        %535 = vmatpush.bf16.msra.mxu0 %v502
        %536 = vmatpush.bf16.msra.mxu0 %v501
        %537 = vmatpush.bf16.msra.mxu0 %v500
        %538 = vmatpush.bf16.msra.mxu0 %v499
        %539 = vmatmul.bf16.gmra.mxu0 %v397
        %v540 = vpop.f32.mrf.mxu0
        %v541 = vadd.f32 %v433, %v540
        %v542 = vpop.f32.mrf.mxu0
        %543 = vdwg.mxu0
        %544 = vmatpush.bf16.msra.mxu0 %v514
        %545 = vmatpush.bf16.msra.mxu0 %v513
        %546 = vmatpush.bf16.msra.mxu0 %v512
        %547 = vmatpush.bf16.msra.mxu0 %v511
        %548 = vmatpush.bf16.msra.mxu0 %v510
        %549 = vmatpush.bf16.msra.mxu0 %v509
        %550 = vmatpush.bf16.msra.mxu0 %v508
        %551 = vmatpush.bf16.msra.mxu0 %v507
        %552 = vmatmul.bf16.gmra.mxu0 %v398
        %v553 = vpop.f32.mrf.mxu0
        %v554 = vadd.f32 %v541, %v553
        %v555 = vpop.f32.mrf.mxu0
        %556 = vdwg.mxu0
        %v557 = vtanh.pop %v554
        %v558 = vmul.f32 %v557, %v557
        %v559 = vsub.f32 1.0, %v558
        %v560 = vld [vmem:[%s6] sm:$0x1]
        %v562 = vperm.slane %v560, 0
        %v564 = vmul.f32 %v559, %v562
        %v565 = vpack.c.bf16 %v564, %v564
        %v566 = vld [vmem:[#allocation9] sm:$0xff]
        %v567 = vld [vmem:[#allocation9 + $0x8] sm:$0xff]
        %v568 = vld [vmem:[#allocation9 + $0x10] sm:$0xff]
        %v569 = vld [vmem:[#allocation9 + $0x18] sm:$0xff]
        %v570 = vld [vmem:[#allocation9 + $0x20] sm:$0xff]
        %v571 = vld [vmem:[#allocation9 + $0x28] sm:$0xff]
        %v572 = vld [vmem:[#allocation9 + $0x30] sm:$0xff]
        %v573 = vld [vmem:[#allocation9 + $0x38] sm:$0xff]
        %v574 = vld [vmem:[#allocation9 + $0x40] sm:$0xff]
        %v575 = vld [vmem:[#allocation9 + $0x48] sm:$0xff]
        %v576 = vld [vmem:[#allocation9 + $0x50] sm:$0xff]
        %v577 = vld [vmem:[#allocation9 + $0x58] sm:$0xff]
        %v578 = vld [vmem:[#allocation9 + $0x60] sm:$0xff]
        %v579 = vld [vmem:[#allocation9 + $0x68] sm:$0xff]
        %v580 = vld [vmem:[#allocation9 + $0x70] sm:$0xff]
        %v581 = vld [vmem:[#allocation9 + $0x78] sm:$0xff]
        %v598 = vunpack.c.l.b16 %v566
        %v599 = vunpack.c.h.b16 %v566
        %v600 = vunpack.c.l.b16 %v567
        %v601 = vunpack.c.h.b16 %v567
        %v602 = vunpack.c.l.b16 %v568
        %v603 = vunpack.c.h.b16 %v568
        %v604 = vunpack.c.l.b16 %v569
        %v605 = vunpack.c.h.b16 %v569
        %v606 = vunpack.c.l.b16 %v570
        %v607 = vunpack.c.h.b16 %v570
        %v608 = vunpack.c.l.b16 %v571
        %v609 = vunpack.c.h.b16 %v571
        %v610 = vunpack.c.l.b16 %v572
        %v611 = vunpack.c.h.b16 %v572
        %v612 = vunpack.c.l.b16 %v573
        %v613 = vunpack.c.h.b16 %v573
        %v614 = vunpack.c.l.b16 %v574
        %v615 = vunpack.c.h.b16 %v574
        %v616 = vunpack.c.l.b16 %v575
        %v617 = vunpack.c.h.b16 %v575
        %v618 = vunpack.c.l.b16 %v576
        %v619 = vunpack.c.h.b16 %v576
        %v620 = vunpack.c.l.b16 %v577
        %v621 = vunpack.c.h.b16 %v577
        %v622 = vunpack.c.l.b16 %v578
        %v623 = vunpack.c.h.b16 %v578
        %v624 = vunpack.c.l.b16 %v579
        %v625 = vunpack.c.h.b16 %v579
        %v626 = vunpack.c.l.b16 %v580
        %v627 = vunpack.c.h.b16 %v580
        %v628 = vunpack.c.l.b16 %v581
        %v629 = vunpack.c.h.b16 %v581
        %v630 = vpack.c.b16 %v600, %v598
        %v631 = vpack.c.b16 %v601, %v599
        %v632 = vpack.c.b16 %v604, %v602
        %v633 = vpack.c.b16 %v605, %v603
        %v634 = vpack.c.b16 %v608, %v606
        %v635 = vpack.c.b16 %v609, %v607
        %v636 = vpack.c.b16 %v612, %v610
        %v637 = vpack.c.b16 %v613, %v611
        %v638 = vpack.c.b16 %v616, %v614
        %v639 = vpack.c.b16 %v617, %v615
        %v640 = vpack.c.b16 %v620, %v618
        %v641 = vpack.c.b16 %v621, %v619
        %v642 = vpack.c.b16 %v624, %v622
        %v643 = vpack.c.b16 %v625, %v623
        %v644 = vpack.c.b16 %v628, %v626
        %v645 = vpack.c.b16 %v629, %v627
        %662 = vmatpush.bf16.msra.mxu0 %v644
        %663 = vmatpush.bf16.msra.mxu0 %v642
        %664 = vmatpush.bf16.msra.mxu0 %v640
        %665 = vmatpush.bf16.msra.mxu0 %v638
        %666 = vmatpush.bf16.msra.mxu0 %v636
        %667 = vmatpush.bf16.msra.mxu0 %v634
        %668 = vmatpush.bf16.msra.mxu0 %v632
        %669 = vmatpush.bf16.msra.mxu0 %v630
        %670 = vmatmul.bf16.gmra.mxu0 %v565
        %v671 = vpop.f32.mrf.mxu0
        %v672 = vadd.f32 0.0, %v671
        %v673 = vpop.f32.mrf.mxu0
        %674 = vdwg.mxu0
        %675 = vmatpush.bf16.msra.mxu0 %v645
        %676 = vmatpush.bf16.msra.mxu0 %v643
        %677 = vmatpush.bf16.msra.mxu0 %v641
        %678 = vmatpush.bf16.msra.mxu0 %v639
        %679 = vmatpush.bf16.msra.mxu0 %v637
        %680 = vmatpush.bf16.msra.mxu0 %v635
        %681 = vmatpush.bf16.msra.mxu0 %v633
        %682 = vmatpush.bf16.msra.mxu0 %v631
        %683 = vmatmul.bf16.gmra.mxu0 %v565
        %v684 = vpop.f32.mrf.mxu0
        %v685 = vadd.f32 0.0, %v684
        %v686 = vpop.f32.mrf.mxu0
        %687 = vdwg.mxu0
        %v688 = vmul.f32 %v672, %v672
        %v689 = vmul.f32 %v685, %v685
        %v690 = vadd.f32 %v688, %v689
        %691 = vadd.xlane.f32.xlu0 %v690
        %v692 = vpop.xlane.xlu0 %691
        %v693 = vrsqrt.pop %v692
        %v694 = vmul.f32 %v693, %v692
        %v695 = vmul.f32 %v694, %v693
        %v696 = vmul.f32 0.5, %v695
        %v697 = vsub.f32 1.5, %v696
        %v698 = vmul.f32 %v693, %v697
        %v699 = vmul.f32 %v692, %v698
        %vm700 = vcmp.eq.f32.partialorder %v692, inf
        %v701 = vsel %vm700, %v692, %v699
        %vm702 = vcmp.eq.f32.partialorder %v692, 0.0
        %v703 = vand.u32 %v692, 2147483648
        %v704 = vsel %vm702, %v703, %v701
        %v705 = vld [vmem:[#allocation2] sm:$0x1]
        %v706 = vsub.f32 %v704, 1.0
        %v707 = vmul.f32 %v706, %v706
        %vm708 = vcmask 7168
        %v709 = vsel %vm708, %v707, 0.0
        %710 = vadd.xlane.f32.xlu0 %v709
        %v711 = vpop.xlane.xlu0 %710
        %v712 = vrot.slane %v711, 4
        %v713 = vadd.f32 %v711, %v712
        %v714 = vrot.slane %v713, 2
        %v715 = vadd.f32 %v713, %v714
        %v716 = vrot.slane %v715, 1
        %v717 = vadd.f32 %v715, %v716
        %s718 = vtos %v717
        %v719 = vstv %s718
        %v720 = vadd.f32 %v705, %v719
        %vm721 = vcmask 0
        %722 = vst.msk [vmem:[#allocation2] sm:$0x1] %vm721, %v720
        %p723 = scmp.eq.s32.totalorder %s26, 1
        // Predicated region
        $region69: #{tpu_custom_call.1} parent=47 // pred_check
          %p724 = pneg %p723
        $region70: #{tpu_custom_call.1} parent=47 // pred_check_branch
          %726 = sbr.rel (%p724) target = $region72
        $region71: #{tpu_custom_call.1} parent=47 // pred_region
          %v727 = vld [vmem:[#allocation2] sm:$0x1]
          %v728 = vmul.f32 %v727, 0.625
          %729 = vst.msk [vmem:[#allocation11] sm:$0x1] %vm721, %v728
        $region72: #{tpu_custom_call.1} parent=47 // pred_fallthru
          _
        // Predicated region
        $region73: #{tpu_custom_call.1} parent=47 // pred_check
          %p730 = pneg %p201
        $region74: #{tpu_custom_call.1} parent=47 // pred_check_branch
          %732 = sbr.rel (%p730) target = $region76
        $region75: #{tpu_custom_call.1} parent=47 // pred_region
          %734 = vsyncadd [#allocation5], 0
          %s736 = sshll.u32 [#allocation11], 4
          %s737 = int_to_ptr.vmem [resolvable:$true] %s736
          %s738 = sshll.u32 %s7, 4
          %s739 = int_to_ptr.hbm [resolvable:$true] %s738
          %741 = dma.vmem_to_hbm [thread:$0]  %s737, 16, %s739, [#allocation5]
        $region76: #{tpu_custom_call.1} parent=47 // pred_fallthru
          _
        // Predicated region
        $region77: #{tpu_custom_call.1} parent=47 // pred_check
          %p742 = pneg %p201
        $region78: #{tpu_custom_call.1} parent=47 // pred_check_branch
          %744 = sbr.rel (%p742) target = $region80
        $region79: #{tpu_custom_call.1} parent=47 // pred_region
          %746 = dma.done [#allocation5], 16
        $region80: #{tpu_custom_call.1} parent=47 // pred_fallthru
          _
      $region48: #{tpu_custom_call.1} parent=5 // pred_fallthru
        _
      %p747 = scmp.le.s32.totalorder 2, %s21
      // Predicated region
      $region81: #{tpu_custom_call.1} parent=5 // pred_check
        %p748 = pneg %p747
      $region82: #{tpu_custom_call.1} parent=5 // pred_check_branch
        %750 = sbr.rel (%p748) target = $region84
      $region83: #{tpu_custom_call.1} parent=5 // pred_region
        %s751 = ssub.s32 %s21, 2
      $region84: #{tpu_custom_call.1} parent=5 // pred_fallthru
        _
    $region6: #{tpu_custom_call.1} parent=1 // loop_footer
      %s25 = sadd.s32 1, %s21
    $region7: #{tpu_custom_call.1} parent=1 // loop_footer_branch
      %20 = sbr.rel target = $region3
    $region8: #{tpu_custom_call.1} parent=1 // loop_exit
      _
    %752 = vsyncpa [#allocation4], 1
    %s753 = scalar_lea.sflag [#allocation4], 1
    %754 = vsyncpa %s753, 1
    %755 = vsyncpa [#allocation7], 1
    %s756 = scalar_lea.sflag [#allocation7], 1
    %757 = vsyncpa %s756, 1
    %758 = vsyncpa [#allocation10], 1
    %759 = vsyncpa [#allocation5], 1
    %s760 = scalar_lea.sflag [#allocation5], 1
    %761 = vsyncpa %s760, 1

</llo_original>
